<compile_context>
chip_gen: v5e
topology: v5e:2x2
jax: 0.10.0
libtpu: 0.0.40
codegen_flags: <defaults>
</compile_context>

<pallas_src>
import numpy as np
import jax
import jax.numpy as jnp
from jax.experimental import pallas as pl
from jax.experimental.pallas import tpu as pltpu


TILE_V = 128   # vocab tile for the fc grid (demo sizing; 512-1024 on v6e/v7x)


def decoder_kernel(e_ref, enc_ref, wh_ref, h0_ref, c0_ref, eh_ref,
                   wgc_ref, wge_ref, bg_ref, wfc_ref, bfc_ref,
                   pred_ref, hc_ref, h1_sc):
    H = h0_ref.shape[-1]

    # Attention + LSTM cell: run once (first vocab tile); h1 persists in a
    # bf16 VMEM scratch for the remaining fc tiles of this step.
    @pl.when(pl.program_id(0) == 0)
    def _():
        h0 = h0_ref[...]                                               # (N, H) f32
        c0 = c0_ref[...]                                               # (N, H) f32

        # gate contribution of [emb | h0] -- independent of the attention
        # chain, so this MXU push overlaps the VPU/EUP softmax below.
        g_eh = (jnp.dot(eh_ref[...].astype(jnp.bfloat16), wge_ref[...],
                        preferred_element_type=jnp.float32)
                + bg_ref[...])                                         # (N, 4H)

        # --- attention: batch-first, lane-dense (N, S) scores, f32 ---
        # e_ref already holds the encoder-only energy term + bias (hoisted).
        h_score = jnp.sum(h0 * wh_ref[...], axis=-1, keepdims=True)    # (N, 1)
        energy = jnp.maximum(e_ref[...] + h_score, 0.0)                # (N, S) relu
        m = jnp.max(energy, axis=-1, keepdims=True)                    # lane reduce
        p = jnp.exp(energy - m)                                        # (N, S)
        denom = jnp.sum(p, axis=-1, keepdims=True)                     # lane reduce
        # context as broadcast-multiply + sublane reduce (no MXU push/pop)
        ctx = jnp.sum(p[:, :, None] * enc_ref[...], axis=1)            # (N, 2H)
        ctx = ctx * pl.reciprocal(denom, approx=True)                  # EUP slot

        # ctx gate contribution (second small MXU push)
        g_ctx = jnp.dot(ctx.astype(jnp.bfloat16), wgc_ref[...],
                        preferred_element_type=jnp.float32)            # (N, 4H)
        gates = g_eh + g_ctx

        # PyTorch gate order: i, f, g, o  (state math stays f32)
        i_g = jax.nn.sigmoid(gates[:, 0 * H:1 * H])
        f_g = jax.nn.sigmoid(gates[:, 1 * H:2 * H])
        g_g = jnp.tanh(gates[:, 2 * H:3 * H])
        o_g = jax.nn.sigmoid(gates[:, 3 * H:4 * H])
        c1 = f_g * c0 + i_g * g_g
        h1 = o_g * jnp.tanh(c1)

        hc_ref[...] = jnp.concatenate([h1, c1], axis=-1)               # (N, 2H) f32
        h1_sc[...] = h1.astype(jnp.bfloat16)                           # persistent

    # --- fc projection tile (every grid step; w_fc tile DMA double-buffered) ---
    pred_ref[...] = (jnp.dot(h1_sc[...], wfc_ref[...],
                             preferred_element_type=jnp.float32)
                     + bfc_ref[...]).astype(pred_ref.dtype)            # (N, TILE_V) bf16


def prepare_decoder_params(params):
    """Per-MODEL precompute: weight splits / pads / casts.  Call once, reuse."""
    H = params["w_hh"].shape[1]
    E = params["emb_table"].shape[1]
    V = params["w_fc"].shape[0]
    V_pad = pl.cdiv(V, TILE_V) * TILE_V

    w_ih_t = params["w_ih"].T                                          # (2H+E, 4H)
    return dict(
        H=H, E=E, V=V, V_pad=V_pad,
        emb_table=params["emb_table"],
        w_h=params["w_energy"][:, :H],                                 # (1, H)
        w_e=params["w_energy"][0, H:],                                 # (2H,)
        b_e=params["b_energy"][0],
        # gate weights pre-split so no in-kernel concat is needed
        wg_ctx=w_ih_t[:2 * H].astype(jnp.bfloat16),                    # (2H, 4H)
        wg_eh=jnp.concatenate([w_ih_t[2 * H:], params["w_hh"].T],
                              axis=0).astype(jnp.bfloat16),            # (E+H, 4H)
        b_gates=(params["b_ih"] + params["b_hh"]).reshape(1, 4 * H),   # combined bias
        # lane-dense fc; padded bias lanes = -1e9 so pad logits never win
        # softmax/argmax and the [:, :V] slice is droppable in decode loops.
        w_fc_pad=jnp.pad(params["w_fc"].T,
                         ((0, 0), (0, V_pad - V))).astype(jnp.bfloat16),  # (H, V_pad)
        b_fc_pad=jnp.concatenate(
            [params["b_fc"], jnp.full((V_pad - V,), -1e9, jnp.float32)]
        ).reshape(1, V_pad),
    )


def prepare_encoder_states(encoder_states, prep):
    """Per-SEQUENCE precompute: batch-first encoder + encoder-only energy."""
    enc_bf = jnp.transpose(encoder_states, (1, 0, 2))                  # (N, S, 2H)
    e_score = jnp.einsum("nsd,d->ns", enc_bf, prep["w_e"]) + prep["b_e"]  # (N, S)
    return enc_bf, e_score


def decoder_step(x, enc_bf, e_score, hidden, cell, prep):
    """One decode step: embedding gather + fused attention/LSTM/fc pallas_call.

    Returns (pred_pad (N, V_pad) bf16, h1 (1,N,H), c1 (1,N,H))."""
    N = x.shape[0]
    S = enc_bf.shape[1]
    H, E, V_pad = prep["H"], prep["E"], prep["V_pad"]
    K_eh = E + H
    n_vt = V_pad // TILE_V

    emb = jnp.take(prep["emb_table"], x, axis=0)                       # (N, E); dropout == identity (eval)
    h0 = hidden[0]                                                     # (N, H)
    c0 = cell[0]                                                       # (N, H)
    emb_h0 = jnp.concatenate([emb, h0], axis=-1)                       # (N, E+H)

    grid_spec = pltpu.PrefetchScalarGridSpec(
        num_scalar_prefetch=0,
        grid=(n_vt,),
        in_specs=[
            pl.BlockSpec((N, S), lambda j: (0, 0)),                    # e_score
            pl.BlockSpec((N, S, 2 * H), lambda j: (0, 0, 0)),          # enc_bf
            pl.BlockSpec((1, H), lambda j: (0, 0)),                    # w_h
            pl.BlockSpec((N, H), lambda j: (0, 0)),                    # h0
            pl.BlockSpec((N, H), lambda j: (0, 0)),                    # c0
            pl.BlockSpec((N, K_eh), lambda j: (0, 0)),                 # [emb|h0]
            pl.BlockSpec((2 * H, 4 * H), lambda j: (0, 0)),            # wg_ctx
            pl.BlockSpec((K_eh, 4 * H), lambda j: (0, 0)),             # wg_eh
            pl.BlockSpec((1, 4 * H), lambda j: (0, 0)),                # b_gates
            pl.BlockSpec((H, TILE_V), lambda j: (0, j)),               # w_fc tile
            pl.BlockSpec((1, TILE_V), lambda j: (0, j)),               # b_fc tile
        ],
        out_specs=(
            pl.BlockSpec((N, TILE_V), lambda j: (0, j)),               # pred tile
            pl.BlockSpec((N, 2 * H), lambda j: (0, 0)),                # [h1|c1]
        ),
        scratch_shapes=[pltpu.VMEM((N, H), jnp.bfloat16)],             # persistent h1
    )

    pred_pad, hc = pl.pallas_call(
        decoder_kernel,
        out_shape=(
            jax.ShapeDtypeStruct((N, V_pad), jnp.bfloat16),            # bf16 logits
            jax.ShapeDtypeStruct((N, 2 * H), jnp.float32),
        ),
        grid_spec=grid_spec,
        # The vocab axis must stay sequential ("arbitrary") because the LSTM
        # body only runs on tile 0 and later tiles read its h1 scratch.  On
        # v7x (2 TCs), make it "parallel" only if the LSTM body is recomputed
        # per core; also set vmem_limit_bytes when TILE_V grows.
        compiler_params=pltpu.CompilerParams(
            dimension_semantics=("arbitrary",),
        ),
    )(e_score, enc_bf, prep["w_h"], h0, c0, emb_h0,
      prep["wg_ctx"], prep["wg_eh"], prep["b_gates"],
      prep["w_fc_pad"], prep["b_fc_pad"])

    h1 = hc[:, :H]
    c1 = hc[:, H:]
    return pred_pad, h1[None], c1[None]


def decoder_forward(x, encoder_states, hidden, cell, params):
    """Module-semantics wrapper (x: (N,) int32; encoder_states: (S,N,2H);
    hidden/cell: (1,N,H)).  In a real autoregressive loop, the two prepare_*
    calls are hoisted out and only decoder_step runs per step."""
    prep = prepare_decoder_params(params)
    enc_bf, e_score = prepare_encoder_states(encoder_states, prep)
    pred_pad, h1, c1 = decoder_step(x, enc_bf, e_score, hidden, cell, prep)
    # slice + f32 cast only for exact module semantics; a decode loop can
    # consume pred_pad directly (padded lanes are -1e9).
    pred = pred_pad[:, :prep["V"]].astype(jnp.float32)
    return pred, h1, c1


def decoder_reference(x, encoder_states, hidden, cell, params):
    """Pure-JAX replica of the PyTorch forward (eval-mode dropout)."""
    H = hidden.shape[-1]
    emb = jnp.take(params["emb_table"], x, axis=0)[None]               # (1, N, E)
    S = encoder_states.shape[0]
    h_reshaped = jnp.repeat(hidden, S, axis=0)                         # (S, N, H)
    cat = jnp.concatenate([h_reshaped, encoder_states], axis=2)        # (S, N, 3H)
    energy = jax.nn.relu(jnp.einsum("snk,ok->sno", cat, params["w_energy"])
                         + params["b_energy"])                         # (S, N, 1)
    attention = jax.nn.softmax(energy, axis=0)
    att = jnp.transpose(attention, (1, 2, 0))                          # (N, 1, S)
    enc = jnp.transpose(encoder_states, (1, 0, 2))                     # (N, S, 2H)
    ctx = jnp.matmul(att, enc)                                         # (N, 1, 2H)
    ctx = jnp.transpose(ctx, (1, 0, 2))                                # (1, N, 2H)
    rnn_in = jnp.concatenate([ctx, emb], axis=2)[0]                    # (N, 2H+E)
    gates = (rnn_in @ params["w_ih"].T + params["b_ih"]
             + hidden[0] @ params["w_hh"].T + params["b_hh"])
    i_g = jax.nn.sigmoid(gates[:, :H])
    f_g = jax.nn.sigmoid(gates[:, H:2 * H])
    g_g = jnp.tanh(gates[:, 2 * H:3 * H])
    o_g = jax.nn.sigmoid(gates[:, 3 * H:])
    c1 = f_g * cell[0] + i_g * g_g
    h1 = o_g * jnp.tanh(c1)
    pred = h1 @ params["w_fc"].T + params["b_fc"]
    return pred, h1[None], c1[None]


if __name__ == "__main__":
    # small shapes consistent with the module
    INPUT_SIZE = 64      # decoder-input vocab (embedding rows)
    EMBED = 16
    HIDDEN = 32
    OUTPUT_SIZE = 64     # target vocab
    N = 2                # batch
    S = 8                # encoder sequence length

    key = jax.random.PRNGKey(0)
    ks = jax.random.split(key, 12)

    params = {
        "emb_table": 0.1 * jax.random.normal(ks[0], (INPUT_SIZE, EMBED), jnp.float32),
        "w_energy":  0.1 * jax.random.normal(ks[1], (1, 3 * HIDDEN), jnp.float32),
        "b_energy":  0.1 * jax.random.normal(ks[2], (1,), jnp.float32),
        "w_ih":      0.1 * jax.random.normal(ks[3], (4 * HIDDEN, 2 * HIDDEN + EMBED), jnp.float32),
        "b_ih":      0.1 * jax.random.normal(ks[4], (4 * HIDDEN,), jnp.float32),
        "w_hh":      0.1 * jax.random.normal(ks[5], (4 * HIDDEN, HIDDEN), jnp.float32),
        "b_hh":      0.1 * jax.random.normal(ks[6], (4 * HIDDEN,), jnp.float32),
        "w_fc":      0.1 * jax.random.normal(ks[7], (OUTPUT_SIZE, HIDDEN), jnp.float32),
        "b_fc":      0.1 * jax.random.normal(ks[8], (OUTPUT_SIZE,), jnp.float32),
    }

    x = jax.random.randint(ks[9], (N,), 0, INPUT_SIZE, dtype=jnp.int32)
    encoder_states = jax.random.normal(ks[10], (S, N, 2 * HIDDEN), jnp.float32)
    hc = jax.random.normal(ks[11], (2, 1, N, HIDDEN), jnp.float32)
    hidden, cell = hc[0], hc[1]

    pred, h1, c1 = decoder_forward(x, encoder_states, hidden, cell, params)
    jax.block_until_ready((pred, h1, c1))

    pred_r, h1_r, c1_r = decoder_reference(x, encoder_states, hidden, cell, params)
    np.testing.assert_allclose(np.asarray(pred), np.asarray(pred_r), rtol=2e-2, atol=2e-2)
    np.testing.assert_allclose(np.asarray(h1), np.asarray(h1_r), rtol=2e-2, atol=2e-2)
    np.testing.assert_allclose(np.asarray(c1), np.asarray(c1_r), rtol=2e-2, atol=2e-2)

    print("KERNEL_OK")
</pallas_src>

<mosaic_0001>
module attributes {stable_mosaic.version = 11 : i64} {
  func.func @decoder_kernel(%arg0: i32, %arg1: memref<2x8xf32, #tpu.memory_space<vmem>>, %arg2: memref<2x8x64xf32, #tpu.memory_space<vmem>>, %arg3: memref<1x32xf32, #tpu.memory_space<vmem>>, %arg4: memref<2x32xf32, #tpu.memory_space<vmem>>, %arg5: memref<2x32xf32, #tpu.memory_space<vmem>>, %arg6: memref<2x48xf32, #tpu.memory_space<vmem>>, %arg7: memref<64x128xbf16, #tpu.memory_space<vmem>>, %arg8: memref<48x128xbf16, #tpu.memory_space<vmem>>, %arg9: memref<1x128xf32, #tpu.memory_space<vmem>>, %arg10: memref<32x128xbf16, #tpu.memory_space<vmem>>, %arg11: memref<1x128xf32, #tpu.memory_space<vmem>>, %arg12: memref<2x128xbf16, #tpu.memory_space<vmem>>, %arg13: memref<2x64xf32, #tpu.memory_space<vmem>>, %arg14: memref<2x32xbf16, #tpu.memory_space<vmem>>) attributes {dimension_semantics = [#tpu.dimension_semantics<arbitrary>], iteration_bounds = array<i64: 1>, scalar_prefetch = 0 : i64, scratch_operands = 1 : i64, tpu.core_type = #tpu.core_type<tc>, window_params = [{pipeline_mode = #tpu.pipeline_mode<synchronous>, transform_indices = @transform_0, window_bounds = array<i64: 2, 8>}, {pipeline_mode = #tpu.pipeline_mode<synchronous>, transform_indices = @transform_1, window_bounds = array<i64: 2, 8, 64>}, {pipeline_mode = #tpu.pipeline_mode<synchronous>, transform_indices = @transform_2, window_bounds = array<i64: 1, 32>}, {pipeline_mode = #tpu.pipeline_mode<synchronous>, transform_indices = @transform_3, window_bounds = array<i64: 2, 32>}, {pipeline_mode = #tpu.pipeline_mode<synchronous>, transform_indices = @transform_4, window_bounds = array<i64: 2, 32>}, {pipeline_mode = #tpu.pipeline_mode<synchronous>, transform_indices = @transform_5, window_bounds = array<i64: 2, 48>}, {pipeline_mode = #tpu.pipeline_mode<synchronous>, transform_indices = @transform_6, window_bounds = array<i64: 64, 128>}, {pipeline_mode = #tpu.pipeline_mode<synchronous>, transform_indices = @transform_7, window_bounds = array<i64: 48, 128>}, {pipeline_mode = #tpu.pipeline_mode<synchronous>, transform_indices = @transform_8, window_bounds = array<i64: 1, 128>}, {transform_indices = @transform_9, window_bounds = array<i64: 32, 128>}, {transform_indices = @transform_10, window_bounds = array<i64: 1, 128>}, {transform_indices = @transform_11, window_bounds = array<i64: 2, 128>}, {pipeline_mode = #tpu.pipeline_mode<synchronous>, transform_indices = @transform_12, window_bounds = array<i64: 2, 64>}]} {
    %c0_i32 = arith.constant 0 : i32
    %0 = arith.cmpi eq, %arg0, %c0_i32 : i32
    %1 = arith.extui %0 : i1 to i32
    %c0_i32_0 = arith.constant 0 : i32
    %2 = arith.cmpi ne, %1, %c0_i32_0 : i32
    scf.if %2 {
      %c0_8 = arith.constant 0 : index
      %c0_9 = arith.constant 0 : index
      %11 = vector.load %arg4[%c0_8, %c0_9] : memref<2x32xf32, #tpu.memory_space<vmem>>, vector<2x32xf32>
      %c0_10 = arith.constant 0 : index
      %c0_11 = arith.constant 0 : index
      %12 = vector.load %arg5[%c0_10, %c0_11] : memref<2x32xf32, #tpu.memory_space<vmem>>, vector<2x32xf32>
      %c0_12 = arith.constant 0 : index
      %c0_13 = arith.constant 0 : index
      %13 = vector.load %arg6[%c0_12, %c0_13] : memref<2x48xf32, #tpu.memory_space<vmem>>, vector<2x48xf32>
      %14 = arith.truncf %13 : vector<2x48xf32> to vector<2x48xbf16>
      %c0_14 = arith.constant 0 : index
      %c0_15 = arith.constant 0 : index
      %15 = vector.load %arg8[%c0_14, %c0_15] : memref<48x128xbf16, #tpu.memory_space<vmem>>, vector<48x128xbf16>
      %cst_16 = arith.constant dense<0.000000e+00> : vector<2x128xf32>
      %16 = tpu.matmul %14, %15, %cst_16 {dimension_numbers = #tpu.dot_dimension_numbers<[1], [0], [0], [1], [0, 0, 1, 1], [], []>} : vector<2x48xbf16>, vector<48x128xbf16>, vector<2x128xf32> -> vector<2x128xf32>
      %c0_17 = arith.constant 0 : index
      %c0_18 = arith.constant 0 : index
      %17 = vector.load %arg9[%c0_17, %c0_18] : memref<1x128xf32, #tpu.memory_space<vmem>>, vector<1x128xf32>
      %18 = vector.broadcast %17 : vector<1x128xf32> to vector<2x128xf32>
      %19 = arith.addf %16, %18 : vector<2x128xf32>
      %c0_19 = arith.constant 0 : index
      %c0_20 = arith.constant 0 : index
      %20 = vector.load %arg3[%c0_19, %c0_20] : memref<1x32xf32, #tpu.memory_space<vmem>>, vector<1x32xf32>
      %21 = vector.broadcast %20 : vector<1x32xf32> to vector<2x32xf32>
      %22 = arith.mulf %11, %21 : vector<2x32xf32>
      %cst_21 = arith.constant dense<0.000000e+00> : vector<2xf32>
      %23 = vector.multi_reduction <add>, %22, %cst_21 [1] : vector<2x32xf32> to vector<2xf32>
      %24 = vector.shape_cast %23 : vector<2xf32> to vector<2x1xf32>
      %c0_22 = arith.constant 0 : index
      %c0_23 = arith.constant 0 : index
      %25 = vector.load %arg1[%c0_22, %c0_23] : memref<2x8xf32, #tpu.memory_space<vmem>>, vector<2x8xf32>
      %26 = vector.broadcast %24 : vector<2x1xf32> to vector<2x8xf32>
      %27 = arith.addf %25, %26 : vector<2x8xf32>
      %cst_24 = arith.constant 0.000000e+00 : f32
      %28 = vector.broadcast %cst_24 : f32 to vector<2x8xf32>
      %29 = arith.maximumf %27, %28 : vector<2x8xf32>
      %cst_25 = arith.constant dense<0xFF800000> : vector<2xf32>
      %30 = vector.multi_reduction <maximumf>, %29, %cst_25 [1] : vector<2x8xf32> to vector<2xf32>
      %31 = vector.shape_cast %30 : vector<2xf32> to vector<2x1xf32>
      %32 = vector.broadcast %31 : vector<2x1xf32> to vector<2x8xf32>
      %33 = arith.subf %29, %32 : vector<2x8xf32>
      %34 = math.exp %33 : vector<2x8xf32>
      %cst_26 = arith.constant dense<0.000000e+00> : vector<2xf32>
      %35 = vector.multi_reduction <add>, %34, %cst_26 [1] : vector<2x8xf32> to vector<2xf32>
      %36 = vector.shape_cast %35 : vector<2xf32> to vector<2x1xf32>
      %37 = vector.shape_cast %34 : vector<2x8xf32> to vector<2x8x1xf32>
      %c0_27 = arith.constant 0 : index
      %c0_28 = arith.constant 0 : index
      %c0_29 = arith.constant 0 : index
      %38 = vector.load %arg2[%c0_27, %c0_28, %c0_29] : memref<2x8x64xf32, #tpu.memory_space<vmem>>, vector<2x8x64xf32>
      %39 = vector.broadcast %37 : vector<2x8x1xf32> to vector<2x8x64xf32>
      %40 = arith.mulf %39, %38 : vector<2x8x64xf32>
      %cst_30 = arith.constant dense<0.000000e+00> : vector<2x64xf32>
      %41 = vector.multi_reduction <add>, %40, %cst_30 [1] : vector<2x8x64xf32> to vector<2x64xf32>
      %42 = tpu.reciprocal %36 {approx = true} : vector<2x1xf32> -> vector<2x1xf32>
      %43 = vector.broadcast %42 : vector<2x1xf32> to vector<2x64xf32>
      %44 = arith.mulf %41, %43 : vector<2x64xf32>
      %45 = arith.truncf %44 : vector<2x64xf32> to vector<2x64xbf16>
      %c0_31 = arith.constant 0 : index
      %c0_32 = arith.constant 0 : index
      %46 = vector.load %arg7[%c0_31, %c0_32] : memref<64x128xbf16, #tpu.memory_space<vmem>>, vector<64x128xbf16>
      %cst_33 = arith.constant dense<0.000000e+00> : vector<2x128xf32>
      %47 = tpu.matmul %45, %46, %cst_33 {dimension_numbers = #tpu.dot_dimension_numbers<[1], [0], [0], [1], [0, 0, 1, 1], [], []>} : vector<2x64xbf16>, vector<64x128xbf16>, vector<2x128xf32> -> vector<2x128xf32>
      %48 = arith.addf %19, %47 : vector<2x128xf32>
      %49 = vector.extract_strided_slice %48 {offsets = [0, 0], sizes = [2, 32], strides = [1, 1]} : vector<2x128xf32> to vector<2x32xf32>
      %50 = arith.negf %49 : vector<2x32xf32>
      %51 = math.exp %50 : vector<2x32xf32>
      %cst_34 = arith.constant 1.000000e+00 : f32
      %52 = vector.broadcast %cst_34 : f32 to vector<2x32xf32>
      %53 = arith.addf %52, %51 : vector<2x32xf32>
      %54 = arith.divf %52, %53 : vector<2x32xf32>
      %55 = vector.extract_strided_slice %48 {offsets = [0, 32], sizes = [2, 32], strides = [1, 1]} : vector<2x128xf32> to vector<2x32xf32>
      %56 = arith.negf %55 : vector<2x32xf32>
      %57 = math.exp %56 : vector<2x32xf32>
      %cst_35 = arith.constant 1.000000e+00 : f32
      %58 = vector.broadcast %cst_35 : f32 to vector<2x32xf32>
      %59 = arith.addf %58, %57 : vector<2x32xf32>
      %60 = arith.divf %58, %59 : vector<2x32xf32>
      %61 = vector.extract_strided_slice %48 {offsets = [0, 64], sizes = [2, 32], strides = [1, 1]} : vector<2x128xf32> to vector<2x32xf32>
      %62 = math.tanh %61 : vector<2x32xf32>
      %63 = vector.extract_strided_slice %48 {offsets = [0, 96], sizes = [2, 32], strides = [1, 1]} : vector<2x128xf32> to vector<2x32xf32>
      %64 = arith.negf %63 : vector<2x32xf32>
      %65 = math.exp %64 : vector<2x32xf32>
      %cst_36 = arith.constant 1.000000e+00 : f32
      %66 = vector.broadcast %cst_36 : f32 to vector<2x32xf32>
      %67 = arith.addf %66, %65 : vector<2x32xf32>
      %68 = arith.divf %66, %67 : vector<2x32xf32>
      %69 = arith.mulf %60, %12 : vector<2x32xf32>
      %70 = arith.mulf %54, %62 : vector<2x32xf32>
      %71 = arith.addf %69, %70 : vector<2x32xf32>
      %72 = math.tanh %71 : vector<2x32xf32>
      %73 = arith.mulf %68, %72 : vector<2x32xf32>
      %74 = tpu.concatenate %73, %71 in 1 : vector<2x32xf32>, vector<2x32xf32> -> vector<2x64xf32>
      %c0_37 = arith.constant 0 : index
      %c0_38 = arith.constant 0 : index
      %75 = vector.load %arg13[%c0_37, %c0_38] : memref<2x64xf32, #tpu.memory_space<vmem>>, vector<2x64xf32>
      tpu.vector_store %arg13[%c0_37, %c0_38], %74 {strides = array<i32>} : memref<2x64xf32, #tpu.memory_space<vmem>>, vector<2x64xf32>,
      %76 = arith.truncf %73 : vector<2x32xf32> to vector<2x32xbf16>
      %c0_39 = arith.constant 0 : index
      %c0_40 = arith.constant 0 : index
      %77 = vector.load %arg14[%c0_39, %c0_40] : memref<2x32xbf16, #tpu.memory_space<vmem>>, vector<2x32xbf16>
      tpu.vector_store %arg14[%c0_39, %c0_40], %76 {strides = array<i32>} : memref<2x32xbf16, #tpu.memory_space<vmem>>, vector<2x32xbf16>,
    } else {
    }
    %c0 = arith.constant 0 : index
    %c0_1 = arith.constant 0 : index
    %3 = vector.load %arg14[%c0, %c0_1] : memref<2x32xbf16, #tpu.memory_space<vmem>>, vector<2x32xbf16>
    %c0_2 = arith.constant 0 : index
    %c0_3 = arith.constant 0 : index
    %4 = vector.load %arg10[%c0_2, %c0_3] : memref<32x128xbf16, #tpu.memory_space<vmem>>, vector<32x128xbf16>
    %cst = arith.constant dense<0.000000e+00> : vector<2x128xf32>
    %5 = tpu.matmul %3, %4, %cst {dimension_numbers = #tpu.dot_dimension_numbers<[1], [0], [0], [1], [0, 0, 1, 1], [], []>} : vector<2x32xbf16>, vector<32x128xbf16>, vector<2x128xf32> -> vector<2x128xf32>
    %c0_4 = arith.constant 0 : index
    %c0_5 = arith.constant 0 : index
    %6 = vector.load %arg11[%c0_4, %c0_5] : memref<1x128xf32, #tpu.memory_space<vmem>>, vector<1x128xf32>
    %7 = vector.broadcast %6 : vector<1x128xf32> to vector<2x128xf32>
    %8 = arith.addf %5, %7 : vector<2x128xf32>
    %9 = arith.truncf %8 : vector<2x128xf32> to vector<2x128xbf16>
    %c0_6 = arith.constant 0 : index
    %c0_7 = arith.constant 0 : index
    %10 = vector.load %arg12[%c0_6, %c0_7] : memref<2x128xbf16, #tpu.memory_space<vmem>>, vector<2x128xbf16>
    tpu.vector_store %arg12[%c0_6, %c0_7], %9 {strides = array<i32>} : memref<2x128xbf16, #tpu.memory_space<vmem>>, vector<2x128xbf16>,
    return
  }
  func.func @transform_0(%arg0: i32) -> (i32, i32) {
    %c0_i32 = arith.constant 0 : i32
    %c0_i32_0 = arith.constant 0 : i32
    %c0_i32_1 = arith.constant 0 : i32
    return %c0_i32, %c0_i32_0 : i32, i32
  }
  func.func @transform_1(%arg0: i32) -> (i32, i32, i32) {
    %c0_i32 = arith.constant 0 : i32
    %c0_i32_0 = arith.constant 0 : i32
    %c0_i32_1 = arith.constant 0 : i32
    %c0_i32_2 = arith.constant 0 : i32
    return %c0_i32, %c0_i32_0, %c0_i32_1 : i32, i32, i32
  }
  func.func @transform_2(%arg0: i32) -> (i32, i32) {
    %c0_i32 = arith.constant 0 : i32
    %c0_i32_0 = arith.constant 0 : i32
    %c0_i32_1 = arith.constant 0 : i32
    return %c0_i32, %c0_i32_0 : i32, i32
  }
  func.func @transform_3(%arg0: i32) -> (i32, i32) {
    %c0_i32 = arith.constant 0 : i32
    %c0_i32_0 = arith.constant 0 : i32
    %c0_i32_1 = arith.constant 0 : i32
    return %c0_i32, %c0_i32_0 : i32, i32
  }
  func.func @transform_4(%arg0: i32) -> (i32, i32) {
    %c0_i32 = arith.constant 0 : i32
    %c0_i32_0 = arith.constant 0 : i32
    %c0_i32_1 = arith.constant 0 : i32
    return %c0_i32, %c0_i32_0 : i32, i32
  }
  func.func @transform_5(%arg0: i32) -> (i32, i32) {
    %c0_i32 = arith.constant 0 : i32
    %c0_i32_0 = arith.constant 0 : i32
    %c0_i32_1 = arith.constant 0 : i32
    return %c0_i32, %c0_i32_0 : i32, i32
  }
  func.func @transform_6(%arg0: i32) -> (i32, i32) {
    %c0_i32 = arith.constant 0 : i32
    %c0_i32_0 = arith.constant 0 : i32
    %c0_i32_1 = arith.constant 0 : i32
    return %c0_i32, %c0_i32_0 : i32, i32
  }
  func.func @transform_7(%arg0: i32) -> (i32, i32) {
    %c0_i32 = arith.constant 0 : i32
    %c0_i32_0 = arith.constant 0 : i32
    %c0_i32_1 = arith.constant 0 : i32
    return %c0_i32, %c0_i32_0 : i32, i32
  }
  func.func @transform_8(%arg0: i32) -> (i32, i32) {
    %c0_i32 = arith.constant 0 : i32
    %c0_i32_0 = arith.constant 0 : i32
    %c0_i32_1 = arith.constant 0 : i32
    return %c0_i32, %c0_i32_0 : i32, i32
  }
  func.func @transform_9(%arg0: i32) -> (i32, i32) {
    %c0_i32 = arith.constant 0 : i32
    %c0_i32_0 = arith.constant 0 : i32
    return %c0_i32, %arg0 : i32, i32
  }
  func.func @transform_10(%arg0: i32) -> (i32, i32) {
    %c0_i32 = arith.constant 0 : i32
    %c0_i32_0 = arith.constant 0 : i32
    return %c0_i32, %arg0 : i32, i32
  }
  func.func @transform_11(%arg0: i32) -> (i32, i32) {
    %c0_i32 = arith.constant 0 : i32
    %c0_i32_0 = arith.constant 0 : i32
    return %c0_i32, %arg0 : i32, i32
  }
  func.func @transform_12(%arg0: i32) -> (i32, i32) {
    %c0_i32 = arith.constant 0 : i32
    %c0_i32_0 = arith.constant 0 : i32
    %c0_i32_1 = arith.constant 0 : i32
    return %c0_i32, %c0_i32_0 : i32, i32
  }
}

</mosaic_0001>

<llo_original>
// kernel: tpu_custom_call.1
$region0: #{tpu_custom_call.1}
  #allocation0 [shape = 'u32[]', space=smem, size = 0x4, offset = 0x4, fixed_abs, tag = 'smem constant byte address 0x4 - core index']
  #allocation1 [shape = 'u32[72,128]{1,0:T(1,128)}', space=vmem, size = 0x9000, scoped, tag = 'internal scratch']
  #allocation2 [shape = 'bf16[2,32]{1,0:T(2,128)(2,1)}', space=vmem, size = 0x200, scoped, tag = 'scratch operand']
  %s0 = inlined_call_operand.hbm [shape: f32[2,8], index: 0, kind: input, shape index: {}]
  %s1 = inlined_call_operand.hbm [shape: f32[2,8,64], index: 1, kind: input, shape index: {}]
  %s2 = inlined_call_operand.hbm [shape: f32[1,32], index: 2, kind: input, shape index: {}]
  %s3 = inlined_call_operand.vmem [shape: f32[2,32], index: 3, kind: input, shape index: {}]
  %s4 = inlined_call_operand.hbm [shape: f32[2,32], index: 4, kind: input, shape index: {}]
  %s5 = inlined_call_operand.vmem [shape: f32[2,48], index: 5, kind: input, shape index: {}]
  %s6 = inlined_call_operand.hbm [shape: bf16[64,128], index: 6, kind: input, shape index: {}]
  %s7 = inlined_call_operand.hbm [shape: bf16[48,128], index: 7, kind: input, shape index: {}]
  %s8 = inlined_call_operand.vmem [shape: f32[1,128], index: 8, kind: input, shape index: {}]
  %s9 = inlined_call_operand.hbm [shape: bf16[32,128], index: 9, kind: input, shape index: {}]
  %s10 = inlined_call_operand.vmem [shape: f32[1,128], index: 10, kind: input, shape index: {}]
  %s11 = inlined_call_operand.hbm [shape: bf16[2,128], index: 11, kind: output, shape index: {0}]
  %s12 = inlined_call_operand.hbm [shape: f32[2,64], index: 12, kind: output, shape index: {1}]
  %13 = xla_tuple %s11, %s12
  %s14 = sld [smem:[#allocation0]]
  $region94: #{tpu_custom_call.1} parent=0
    _
  %s16 = ssub.s32 1, %s14
  %s17 = scalar_select 0, %s16, %s14
  $region1: #{tpu_custom_call.1} parent=0
    #allocation3 [shape = 'u8[1024]{0}', space=vmem, size = 0x400, scoped, tag = 'input window, operand 0, single buffered']
    #allocation4 [shape = 's32[1]{0}', space=sflag, size = 0x4, scoped, tag = 'scoped memory for tpu_custom_call.1']
    #allocation5 [shape = 's32[1]{0}', space=sflag, size = 0x4, scoped, tag = 'scoped memory for tpu_custom_call.1']
    #allocation6 [shape = 'u8[8192]{0}', space=vmem, size = 0x2000, scoped, tag = 'input window, operand 1, single buffered']
    #allocation7 [shape = 's32[1]{0}', space=sflag, size = 0x4, scoped, tag = 'scoped memory for tpu_custom_call.1']
    #allocation8 [shape = 'u8[512]{0}', space=vmem, size = 0x400, scoped, tag = 'input window, operand 2, single buffered']
    #allocation9 [shape = 'u8[1024]{0}', space=vmem, size = 0x400, scoped, tag = 'input window, operand 4, single buffered']
    #allocation10 [shape = 's32[1]{0}', space=sflag, size = 0x4, scoped, tag = 'scoped memory for tpu_custom_call.1']
    #allocation11 [shape = 'u8[16384]{0}', space=vmem, size = 0x4000, scoped, tag = 'input window, operand 6, single buffered']
    #allocation12 [shape = 'u8[12288]{0}', space=vmem, size = 0x3000, scoped, tag = 'input window, operand 7, single buffered']
    #allocation13 [shape = 's32[1]{0}', space=sflag, size = 0x4, scoped, tag = 'scoped memory for tpu_custom_call.1']
    #allocation14 [shape = 'u8[8192]{0}', space=vmem, size = 0x2000, scoped, tag = 'input window, operand 9, single buffered']
    #allocation15 [shape = 'u8[512]{0}', space=vmem, size = 0x400, scoped, tag = 'output window, operand 0, single buffered']
    #allocation16 [shape = 'u8[1024]{0}', space=vmem, size = 0x400, scoped, tag = 'output window, operand 1, single buffered']
    #allocation17 [shape = 's32[1]{0}', space=sflag, size = 0x4, scoped, tag = 'scoped memory for tpu_custom_call.1']
    %18 = vsyncpa [#allocation4], 0
    %19 = vsyncpa [#allocation7], 0
    %20 = vsyncpa [#allocation10], 0
    %21 = vsyncpa [#allocation13], 0
    %22 = vsyncpa [#allocation5], 0
    %23 = vsyncpa [#allocation17], 0
    // Predicated region
    $region2: #{tpu_custom_call.1} parent=1 // pred_check
      _
    $region3: #{tpu_custom_call.1} parent=1 // pred_check_branch
      %25 = sbr.rel (0) target = $region5
    $region4: #{tpu_custom_call.1} parent=1 // pred_region
      %27 = vsyncadd [#allocation4], 0
      %s29 = sshll.u32 %s0, 4
      %s30 = int_to_ptr.hbm [resolvable:$true] %s29
      %s31 = sshll.u32 [#allocation3], 4
      %s32 = int_to_ptr.vmem [resolvable:$true] %s31
      %34 = dma.hbm_to_vmem [thread:$0]  %s30, 32, %s32, [#allocation4]
    $region5: #{tpu_custom_call.1} parent=1 // pred_fallthru
      _
    // Predicated region
    $region6: #{tpu_custom_call.1} parent=1 // pred_check
      _
    $region7: #{tpu_custom_call.1} parent=1 // pred_check_branch
      %36 = sbr.rel (0) target = $region9
    $region8: #{tpu_custom_call.1} parent=1 // pred_region
      %38 = vsyncadd [#allocation7], 0
      %s39 = sshll.u32 %s1, 4
      %s40 = int_to_ptr.hbm [resolvable:$true] %s39
      %s41 = sshll.u32 [#allocation6], 4
      %s42 = int_to_ptr.vmem [resolvable:$true] %s41
      %47 = dma.hbm_to_vmem [thread:$0]  %s40, 256, %s42, [#allocation7], 128, 128, 8
    $region9: #{tpu_custom_call.1} parent=1 // pred_fallthru
      _
    // Predicated region
    $region10: #{tpu_custom_call.1} parent=1 // pred_check
      _
    $region11: #{tpu_custom_call.1} parent=1 // pred_check_branch
      %49 = sbr.rel (0) target = $region13
    $region12: #{tpu_custom_call.1} parent=1 // pred_region
      %51 = vsyncadd [#allocation7], 0
      %s53 = sshll.u32 %s2, 4
      %s54 = int_to_ptr.hbm [resolvable:$true] %s53
      %s55 = sshll.u32 [#allocation8], 4
      %s56 = int_to_ptr.vmem [resolvable:$true] %s55
      %58 = dma.hbm_to_vmem [thread:$0]  %s54, 16, %s56, [#allocation7]
    $region13: #{tpu_custom_call.1} parent=1 // pred_fallthru
      _
    // Predicated region
    $region14: #{tpu_custom_call.1} parent=1 // pred_check
      _
    $region15: #{tpu_custom_call.1} parent=1 // pred_check_branch
      %60 = sbr.rel (0) target = $region17
    $region16: #{tpu_custom_call.1} parent=1 // pred_region
      _
    $region17: #{tpu_custom_call.1} parent=1 // pred_fallthru
      _
    // Predicated region
    $region18: #{tpu_custom_call.1} parent=1 // pred_check
      _
    $region19: #{tpu_custom_call.1} parent=1 // pred_check_branch
      %62 = sbr.rel (0) target = $region21
    $region20: #{tpu_custom_call.1} parent=1 // pred_region
      %64 = vsyncadd [#allocation10], 0
      %s66 = sshll.u32 %s4, 4
      %s67 = int_to_ptr.hbm [resolvable:$true] %s66
      %s68 = sshll.u32 [#allocation9], 4
      %s69 = int_to_ptr.vmem [resolvable:$true] %s68
      %71 = dma.hbm_to_vmem [thread:$0]  %s67, 32, %s69, [#allocation10]
    $region21: #{tpu_custom_call.1} parent=1 // pred_fallthru
      _
    // Predicated region
    $region22: #{tpu_custom_call.1} parent=1 // pred_check
      _
    $region23: #{tpu_custom_call.1} parent=1 // pred_check_branch
      %73 = sbr.rel (0) target = $region25
    $region24: #{tpu_custom_call.1} parent=1 // pred_region
      _
    $region25: #{tpu_custom_call.1} parent=1 // pred_fallthru
      _
    // Predicated region
    $region26: #{tpu_custom_call.1} parent=1 // pred_check
      _
    $region27: #{tpu_custom_call.1} parent=1 // pred_check_branch
      %75 = sbr.rel (0) target = $region29
    $region28: #{tpu_custom_call.1} parent=1 // pred_region
      %77 = vsyncadd [#allocation10], 0
      %s78 = sshll.u32 %s6, 4
      %s79 = int_to_ptr.hbm [resolvable:$true] %s78
      %s80 = sshll.u32 [#allocation11], 4
      %s81 = int_to_ptr.vmem [resolvable:$true] %s80
      %86 = dma.hbm_to_vmem [thread:$0]  %s79, 512, %s81, [#allocation10], 64, 64, 4
    $region29: #{tpu_custom_call.1} parent=1 // pred_fallthru
      _
    // Predicated region
    $region30: #{tpu_custom_call.1} parent=1 // pred_check
      _
    $region31: #{tpu_custom_call.1} parent=1 // pred_check_branch
      %88 = sbr.rel (0) target = $region33
    $region32: #{tpu_custom_call.1} parent=1 // pred_region
      %90 = vsyncadd [#allocation13], 0
      %s91 = sshll.u32 %s7, 4
      %s92 = int_to_ptr.hbm [resolvable:$true] %s91
      %s93 = sshll.u32 [#allocation12], 4
      %s94 = int_to_ptr.vmem [resolvable:$true] %s93
      %99 = dma.hbm_to_vmem [thread:$0]  %s92, 384, %s94, [#allocation13], 64, 64, 4
    $region33: #{tpu_custom_call.1} parent=1 // pred_fallthru
      _
    // Predicated region
    $region34: #{tpu_custom_call.1} parent=1 // pred_check
      _
    $region35: #{tpu_custom_call.1} parent=1 // pred_check_branch
      %101 = sbr.rel (0) target = $region37
    $region36: #{tpu_custom_call.1} parent=1 // pred_region
      _
    $region37: #{tpu_custom_call.1} parent=1 // pred_fallthru
      _
    // Predicated region
    $region38: #{tpu_custom_call.1} parent=1 // pred_check
      _
    $region39: #{tpu_custom_call.1} parent=1 // pred_check_branch
      %103 = sbr.rel (0) target = $region41
    $region40: #{tpu_custom_call.1} parent=1 // pred_region
      %105 = vsyncadd [#allocation13], 0
      %s106 = sshll.u32 %s9, 4
      %s107 = int_to_ptr.hbm [resolvable:$true] %s106
      %s108 = sshll.u32 [#allocation14], 4
      %s109 = int_to_ptr.vmem [resolvable:$true] %s108
      %114 = dma.hbm_to_vmem [thread:$0]  %s107, 256, %s109, [#allocation13], 64, 64, 4
    $region41: #{tpu_custom_call.1} parent=1 // pred_fallthru
      _
    // Predicated region
    $region42: #{tpu_custom_call.1} parent=1 // pred_check
      _
    $region43: #{tpu_custom_call.1} parent=1 // pred_check_branch
      %116 = sbr.rel (0) target = $region45
    $region44: #{tpu_custom_call.1} parent=1 // pred_region
      _
    $region45: #{tpu_custom_call.1} parent=1 // pred_fallthru
      _
    // Predicated region
    $region46: #{tpu_custom_call.1} parent=1 // pred_check
      _
    $region47: #{tpu_custom_call.1} parent=1 // pred_check_branch
      %118 = sbr.rel (0) target = $region49
    $region48: #{tpu_custom_call.1} parent=1 // pred_region
      %120 = dma.done [#allocation4], 32
    $region49: #{tpu_custom_call.1} parent=1 // pred_fallthru
      _
    // Predicated region
    $region50: #{tpu_custom_call.1} parent=1 // pred_check
      _
    $region51: #{tpu_custom_call.1} parent=1 // pred_check_branch
      %122 = sbr.rel (0) target = $region53
    $region52: #{tpu_custom_call.1} parent=1 // pred_region
      %124 = dma.done [#allocation7], 256
    $region53: #{tpu_custom_call.1} parent=1 // pred_fallthru
      _
    // Predicated region
    $region54: #{tpu_custom_call.1} parent=1 // pred_check
      _
    $region55: #{tpu_custom_call.1} parent=1 // pred_check_branch
      %126 = sbr.rel (0) target = $region57
    $region56: #{tpu_custom_call.1} parent=1 // pred_region
      %128 = dma.done [#allocation7], 16
    $region57: #{tpu_custom_call.1} parent=1 // pred_fallthru
      _
    // Predicated region
    $region58: #{tpu_custom_call.1} parent=1 // pred_check
      _
    $region59: #{tpu_custom_call.1} parent=1 // pred_check_branch
      %130 = sbr.rel (0) target = $region61
    $region60: #{tpu_custom_call.1} parent=1 // pred_region
      %132 = dma.done [#allocation10], 32
    $region61: #{tpu_custom_call.1} parent=1 // pred_fallthru
      _
    // Predicated region
    $region62: #{tpu_custom_call.1} parent=1 // pred_check
      _
    $region63: #{tpu_custom_call.1} parent=1 // pred_check_branch
      %134 = sbr.rel (0) target = $region65
    $region64: #{tpu_custom_call.1} parent=1 // pred_region
      %136 = dma.done [#allocation10], 512
    $region65: #{tpu_custom_call.1} parent=1 // pred_fallthru
      _
    // Predicated region
    $region66: #{tpu_custom_call.1} parent=1 // pred_check
      _
    $region67: #{tpu_custom_call.1} parent=1 // pred_check_branch
      %138 = sbr.rel (0) target = $region69
    $region68: #{tpu_custom_call.1} parent=1 // pred_region
      %140 = dma.done [#allocation13], 384
    $region69: #{tpu_custom_call.1} parent=1 // pred_fallthru
      _
    // Predicated region
    $region70: #{tpu_custom_call.1} parent=1 // pred_check
      _
    $region71: #{tpu_custom_call.1} parent=1 // pred_check_branch
      %142 = sbr.rel (0) target = $region73
    $region72: #{tpu_custom_call.1} parent=1 // pred_region
      %144 = dma.done [#allocation13], 256
    $region73: #{tpu_custom_call.1} parent=1 // pred_fallthru
      _
    %p146 = scmp.eq.s32.totalorder 0, 0
    // Predicated region
    $region74: #{tpu_custom_call.1} parent=1 // pred_check
      %p147 = pneg %p146
    $region75: #{tpu_custom_call.1} parent=1 // pred_check_branch
      %149 = sbr.rel (%p147) target = $region77
    $region76: #{tpu_custom_call.1} parent=1 // pred_region
      %v150 = vld [vmem:[%s3] sm:$0x3]
      %v151 = vld [vmem:[#allocation9] sm:$0x3]
      %v152 = vld [vmem:[%s5] sm:$0x3]
      %v153 = vpack.c.bf16 %v152, %v152
      %v154 = vld [vmem:[#allocation12] sm:$0xf]
      %v155 = vld [vmem:[#allocation12 + $0x4] sm:$0xf]
      %v156 = vld [vmem:[#allocation12 + $0x8] sm:$0xf]
      %v157 = vld [vmem:[#allocation12 + $0xc] sm:$0xf]
      %v158 = vld [vmem:[#allocation12 + $0x10] sm:$0xf]
      %v159 = vld [vmem:[#allocation12 + $0x14] sm:$0xf]
      %v160 = vld [vmem:[%s8] sm:$0x1]
      %v162 = vperm.slane %v160, 0
      %v170 = vunpack.c.l.b16 %v154
      %v171 = vunpack.c.l.b16 %v155
      %v172 = vunpack.c.l.b16 %v156
      %v173 = vunpack.c.l.b16 %v157
      %v174 = vunpack.c.l.b16 %v158
      %v175 = vunpack.c.l.b16 %v159
      %v176 = vpack.c.b16 %v171, %v170
      %v177 = vpack.c.b16 %v173, %v172
      %v178 = vpack.c.b16 %v175, %v174
      %vm182 = vcmask 392192
      %v184 = vsel %vm182, %v153, 0
      %186 = vmatpush.bf16.msra.mxu0 0
      %187 = vmatpush.bf16.msra.mxu0 0
      %188 = vmatpush.bf16.msra.mxu0 0
      %189 = vmatpush.bf16.msra.mxu0 0
      %190 = vmatpush.bf16.msra.mxu0 0
      %191 = vmatpush.bf16.msra.mxu0 %v178
      %192 = vmatpush.bf16.msra.mxu0 %v177
      %193 = vmatpush.bf16.msra.mxu0 %v176
      %194 = vmatmul.bf16.gmra.mxu0 %v184
      %v195 = vpop.f32.mrf.mxu0
      %v196 = vadd.f32 %v162, %v195
      %v197 = vpop.f32.mrf.mxu0
      %198 = vdwg.mxu0
      %v199 = vld [vmem:[#allocation8] sm:$0x1]
      %v201 = vperm.slane %v199, 0
      %v203 = vmul.f32 %v150, %v201
      %vm204 = vcmask 254976
      %v205 = vsel %vm204, %v203, 0.0
      %206 = vadd.xlane.f32.xlu0 %v205
      %v207 = vpop.xlane.xlu0 %206
      %v208 = vld [vmem:[#allocation3] sm:$0x3]
      %v209 = vadd.f32 %v208, %v207
      %v210 = vmax.f32 %v209, 0.0
      %vm211 = vcmask 58368
      %v212 = vsel %vm211, %v210, -inf
      %213 = vmax.xlane.f32.xlu0 %v212
      %v214 = vpop.xlane.xlu0 %213
      %v215 = vsub.f32 %v210, %v214
      %v216 = vmul.f32 %v215, 1.442695
      %v217 = vpow.pop %v216
      %v218 = vsel %vm211, %v217, 0.0
      %219 = vadd.xlane.f32.xlu0 %v218
      %v220 = vpop.xlane.xlu0 %219
      %v221 = vperm.slane %v217, 0
      %v222 = vlaneseq
      %v223 = vshrl.u32 %v222, 7
      %225 = vset.pattern.permute.xlu0 %v223
      %226 = vperm.xlu0 %225, %v221
      %v227 = vpop.permute.xlu0 %226
      %v228 = vperm.slane %v217, 1
      %v229 = vlaneseq
      %v230 = vshrl.u32 %v229, 7
      %232 = vset.pattern.permute.xlu0 %v230
      %233 = vperm.xlu0 %232, %v228
      %v234 = vpop.permute.xlu0 %233
      %v235 = vld [vmem:[#allocation6] sm:$0xff]
      %v236 = vld [vmem:[#allocation6 + $0x8] sm:$0xff]
      %v237 = vmul.f32 %v227, %v235
      %v238 = vmul.f32 %v234, %v236
      %vm239 = vcmask 523264
      %v240 = vsel %vm239, %v237, 0.0
      %v241 = vrot.slane %v240, 4
      %v242 = vadd.f32 %v240, %v241
      %v243 = vrot.slane %v242, 2
      %v244 = vadd.f32 %v242, %v243
      %v245 = vrot.slane %v244, 1
      %v246 = vadd.f32 %v244, %v245
      %v247 = vsel %vm239, %v238, 0.0
      %v248 = vrot.slane %v247, 4
      %v249 = vadd.f32 %v247, %v248
      %v250 = vrot.slane %v249, 2
      %v251 = vadd.f32 %v249, %v250
      %v252 = vrot.slane %v251, 1
      %v253 = vadd.f32 %v251, %v252
      %v254 = vrcp.pop %v220
      %v256 = vrot.slane %v254, 1
      %v259 = vmul.f32 %v246, %v254
      %v260 = vmul.f32 %v253, %v256
      %v261 = vpack.c.bf16 %v259, %v259
      %v262 = vpack.c.bf16 %v260, %v260
      %v263 = vld [vmem:[#allocation11] sm:$0xf]
      %v264 = vld [vmem:[#allocation11 + $0x4] sm:$0xf]
      %v265 = vld [vmem:[#allocation11 + $0x8] sm:$0xf]
      %v266 = vld [vmem:[#allocation11 + $0xc] sm:$0xf]
      %v267 = vld [vmem:[#allocation11 + $0x10] sm:$0xf]
      %v268 = vld [vmem:[#allocation11 + $0x14] sm:$0xf]
      %v269 = vld [vmem:[#allocation11 + $0x18] sm:$0xf]
      %v270 = vld [vmem:[#allocation11 + $0x1c] sm:$0xf]
      %v273 = vunpack.c.l.b16 %v261
      %v274 = vunpack.c.l.b16 %v262
      %v275 = vrot.slane %v274, 7
      %vm276 = vcmask 1041409
      %v277 = vsel %vm276, %v275, %v273
      %v278 = vpack.c.b16 %v277, %v277
      %v287 = vunpack.c.l.b16 %v263
      %v288 = vunpack.c.l.b16 %v264
      %v289 = vunpack.c.l.b16 %v265
      %v290 = vunpack.c.l.b16 %v266
      %v291 = vunpack.c.l.b16 %v267
      %v292 = vunpack.c.l.b16 %v268
      %v293 = vunpack.c.l.b16 %v269
      %v294 = vunpack.c.l.b16 %v270
      %v295 = vpack.c.b16 %v288, %v287
      %v296 = vpack.c.b16 %v290, %v289
      %v297 = vpack.c.b16 %v292, %v291
      %v298 = vpack.c.b16 %v294, %v293
      %v304 = vsel %vm239, %v278, 0
      %306 = vmatpush.bf16.msra.mxu0 0
      %307 = vmatpush.bf16.msra.mxu0 0
      %308 = vmatpush.bf16.msra.mxu0 0
      %309 = vmatpush.bf16.msra.mxu0 0
      %310 = vmatpush.bf16.msra.mxu0 %v298
      %311 = vmatpush.bf16.msra.mxu0 %v297
      %312 = vmatpush.bf16.msra.mxu0 %v296
      %313 = vmatpush.bf16.msra.mxu0 %v295
      %314 = vmatmul.bf16.gmra.mxu0 %v304
      %v315 = vpop.f32.mrf.mxu0
      %v316 = vadd.f32 0.0, %v315
      %v317 = vpop.f32.mrf.mxu0
      %318 = vdwg.mxu0
      %v319 = vadd.f32 %v196, %v316
      %v320 = vxor.u32 %v319, 2147483648
      %v321 = vmul.f32 %v320, 1.442695
      %v322 = vpow.pop %v321
      %v323 = vadd.f32 %v322, 1.0
      %v324 = vrcp.pop %v323
      %v325 = vmul.f32 %v323, %v324
      %v326 = vsub.f32 1.0, %v325
      %v327 = vmul.f32 %v324, %v326
      %v328 = vadd.f32 %v324, %v327
      %vm329 = vweird.f32 %v323
      %vm330 = vweird.f32 %v324
      %vm331 = vmor %vm329, %vm330
      %v332 = vsel %vm331, %v324, %v328
      %v333 = vand.u32 2147483647, %v323
      %vm334 = vcmp.eq.f32.partialorder %v333, 8.507059e+37
      %v335 = vand.u32 %v323, 2147483648
      %v336 = vor.u32 1.1754944e-38, %v335
      %v337 = vsel %vm334, %v336, %v332
      %v338 = vmul.f32 1.0, %v337
      %v339 = vtanh.pop %v319
      %341 = vrot.lane.b32.xlu0 %v151, 32
      %v342 = vpop.permute.xlu0 %341
      %v344 = vmul.f32 %v338, %v342
      %346 = vrot.lane.b32.xlu0 %v339, 64
      %v347 = vpop.permute.xlu0 %346
      %v349 = vmul.f32 %v338, %v347
      %351 = vrot.lane.b32.xlu0 %v349, 32
      %v352 = vpop.permute.xlu0 %351
      %v354 = vadd.f32 %v344, %v352
      %v355 = vtanh.pop %v354
      %357 = vrot.lane.b32.xlu0 %v355, 64
      %v358 = vpop.permute.xlu0 %357
      %v360 = vmul.f32 %v338, %v358
      %362 = vrot.lane.b32.xlu0 %v360, 32
      %v363 = vpop.permute.xlu0 %362
      %vm365 = vcmask 261120
      %v366 = vsel %vm365, %v363, %v354
      %vm367 = vcmask 517120
      %368 = vst.msk [vmem:[#allocation16] sm:$0x3] %vm367, %v366
      %v369 = vpack.c.bf16 %v360, %v360
      %v371 = vrot.slane %v369, 3
      %vm372 = vcmask 1040384
      %v375 = vsel %vm372, %v369, %v371
      %377 = vrot.lane.b32.xlu0 %v375, 32
      %v378 = vpop.permute.xlu0 %377
      %vm380 = vcmask 253952
      %381 = vst.msk [vmem:[#allocation2] sm:$0x1] %vm380, %v378
    $region77: #{tpu_custom_call.1} parent=1 // pred_fallthru
      _
    %v382 = vld [vmem:[#allocation2] sm:$0x1]
    %v383 = vld [vmem:[#allocation14] sm:$0xf]
    %v384 = vld [vmem:[#allocation14 + $0x4] sm:$0xf]
    %v385 = vld [vmem:[#allocation14 + $0x8] sm:$0xf]
    %v386 = vld [vmem:[#allocation14 + $0xc] sm:$0xf]
    %v387 = vld [vmem:[%s10] sm:$0x1]
    %v389 = vperm.slane %v387, 0
    %v395 = vunpack.c.l.b16 %v383
    %v396 = vunpack.c.l.b16 %v384
    %v397 = vunpack.c.l.b16 %v385
    %v398 = vunpack.c.l.b16 %v386
    %v399 = vpack.c.b16 %v396, %v395
    %v400 = vpack.c.b16 %v398, %v397
    %vm403 = vcmask 261120
    %v405 = vsel %vm403, %v382, 0
    %407 = vmatpush.bf16.msra.mxu0 0
    %408 = vmatpush.bf16.msra.mxu0 0
    %409 = vmatpush.bf16.msra.mxu0 0
    %410 = vmatpush.bf16.msra.mxu0 0
    %411 = vmatpush.bf16.msra.mxu0 0
    %412 = vmatpush.bf16.msra.mxu0 0
    %413 = vmatpush.bf16.msra.mxu0 %v400
    %414 = vmatpush.bf16.msra.mxu0 %v399
    %415 = vmatmul.bf16.gmra.mxu0 %v405
    %v416 = vpop.f32.mrf.mxu0
    %v417 = vadd.f32 %v389, %v416
    %v418 = vpop.f32.mrf.mxu0
    %419 = vdwg.mxu0
    %v420 = vpack.c.bf16 %v417, %v417
    %421 = vst [vmem:[#allocation15] sm:$0x1] %v420
    // Predicated region
    $region78: #{tpu_custom_call.1} parent=1 // pred_check
      _
    $region79: #{tpu_custom_call.1} parent=1 // pred_check_branch
      %423 = sbr.rel (0) target = $region81
    $region80: #{tpu_custom_call.1} parent=1 // pred_region
      %425 = vsyncadd [#allocation5], 0
      %s427 = sshll.u32 [#allocation15], 4
      %s428 = int_to_ptr.vmem [resolvable:$true] %s427
      %s429 = sshll.u32 %s11, 4
      %s430 = int_to_ptr.hbm [resolvable:$true] %s429
      %432 = dma.vmem_to_hbm [thread:$0]  %s428, 16, %s430, [#allocation5]
    $region81: #{tpu_custom_call.1} parent=1 // pred_fallthru
      _
    // Predicated region
    $region82: #{tpu_custom_call.1} parent=1 // pred_check
      _
    $region83: #{tpu_custom_call.1} parent=1 // pred_check_branch
      %434 = sbr.rel (0) target = $region85
    $region84: #{tpu_custom_call.1} parent=1 // pred_region
      %436 = vsyncadd [#allocation17], 0
      %s438 = sshll.u32 [#allocation16], 4
      %s439 = int_to_ptr.vmem [resolvable:$true] %s438
      %s440 = sshll.u32 %s12, 4
      %s441 = int_to_ptr.hbm [resolvable:$true] %s440
      %443 = dma.vmem_to_hbm [thread:$0]  %s439, 32, %s441, [#allocation17]
    $region85: #{tpu_custom_call.1} parent=1 // pred_fallthru
      _
    // Predicated region
    $region86: #{tpu_custom_call.1} parent=1 // pred_check
      _
    $region87: #{tpu_custom_call.1} parent=1 // pred_check_branch
      %445 = sbr.rel (0) target = $region89
    $region88: #{tpu_custom_call.1} parent=1 // pred_region
      %447 = dma.done [#allocation5], 16
    $region89: #{tpu_custom_call.1} parent=1 // pred_fallthru
      _
    // Predicated region
    $region90: #{tpu_custom_call.1} parent=1 // pred_check
      _
    $region91: #{tpu_custom_call.1} parent=1 // pred_check_branch
      %449 = sbr.rel (0) target = $region93
    $region92: #{tpu_custom_call.1} parent=1 // pred_region
      %451 = dma.done [#allocation17], 32
    $region93: #{tpu_custom_call.1} parent=1 // pred_fallthru
      _
    %452 = vsyncpa [#allocation4], 1
    %453 = vsyncpa [#allocation7], 1
    %454 = vsyncpa [#allocation10], 1
    %455 = vsyncpa [#allocation13], 1
    %456 = vsyncpa [#allocation5], 1
    %457 = vsyncpa [#allocation17], 1

</llo_original>
